<compile_context>
chip_gen: v7x
topology: tpu7x:2x2x1
jax: 0.10.0
libtpu: 0.0.40
codegen_flags: <defaults>
</compile_context>

<pallas_src>
import functools

import jax
import jax.numpy as jnp
from jax.experimental import pallas as pl
from jax.experimental.pallas import tpu as pltpu


LANE = 128
TILE_ROWS = 2048  # 2048*128*4B = 1 MiB per f32 tile (2 MiB in+out per buffer)


def _plr_spiking_kernel(x_ref, o_ref):
    # heaviside: 1.0 where x >= 0 else 0.0 (in output dtype)
    x = x_ref[...]
    o_ref[...] = (x >= 0).astype(o_ref.dtype)


def _plr_primitive_kernel(w, c, x_ref, o_ref):
    # piecewise-linear primitive of the surrogate gradient (no transcendentals)
    x = x_ref[...].astype(jnp.float32)
    mid = x * (1.0 / (2.0 * w)) + 0.5
    if c == 0.0:
        out = jnp.where(x < -w, 0.0, jnp.where(x > w, 1.0, mid))
    else:
        cw = c * w
        lo = c * x + cw           # x < -w
        hi = c * x + (1.0 - cw)   # x >  w
        out = jnp.where(x < -w, lo, jnp.where(x > w, hi, mid))
    o_ref[...] = out.astype(o_ref.dtype)


def _run_elementwise(kernel_fn, x, *, flops_per_elem=2, trans_per_elem=0):
    """Flatten x to a lane-dense (rows, 128) slab, run kernel, reshape back."""
    orig_shape = x.shape
    orig_dtype = x.dtype
    n = x.size
    if n == 0:
        return x

    # Minimal alignment: flat length must be a multiple of 8*128 so the 2D
    # slab tiles cleanly. NCHW feature maps are usually already aligned, in
    # which case no pad / no slice-back copy happens at all.
    align = 8 * LANE
    n_pad = pl.cdiv(n, align) * align
    x_flat = jnp.ravel(x)
    padded = n_pad != n
    if padded:
        x_flat = jnp.pad(x_flat, (0, n_pad - n))
    rows = n_pad // LANE
    x2d = x_flat.reshape(rows, LANE)

    # Clamp tile rows for small inputs; grid handles a ragged final block
    # (tile rows stay a multiple of 8, lane width stays 128).
    tile_rows = min(TILE_ROWS, rows)
    grid = (pl.cdiv(rows, tile_rows),)

    itemsize = jnp.dtype(orig_dtype).itemsize
    cost = pl.CostEstimate(
        flops=flops_per_elem * n,
        transcendentals=trans_per_elem * n,
        bytes_accessed=2 * n * itemsize,
    )

    out2d = pl.pallas_call(
        kernel_fn,
        out_shape=jax.ShapeDtypeStruct((rows, LANE), orig_dtype),
        grid_spec=pltpu.PrefetchScalarGridSpec(
            num_scalar_prefetch=0,
            grid=grid,
            in_specs=[pl.BlockSpec((tile_rows, LANE), lambda i: (i, 0))],
            out_specs=pl.BlockSpec((tile_rows, LANE), lambda i: (i, 0)),
        ),
        compiler_params=pltpu.CompilerParams(
            dimension_semantics=("parallel",)),
        cost_estimate=cost,
    )(x2d)

    if padded:
        out_flat = out2d.reshape(-1)[:n]
        return out_flat.reshape(orig_shape)
    return out2d.reshape(orig_shape)


class PiecewiseLeakyReLU:
    """JAX/Pallas port of spikingjelly PiecewiseLeakyReLU (forward pass only)."""

    def __init__(self, w=1.0, c=0.01, spiking=True):
        assert w > 0.0
        self.w = float(w)
        self.c = float(c)
        self.spiking = spiking

    def set_spiking_mode(self, spiking: bool):
        self.spiking = spiking

    def __call__(self, x):
        if self.spiking:
            return _run_elementwise(_plr_spiking_kernel, x,
                                    flops_per_elem=1, trans_per_elem=0)
        kern = functools.partial(_plr_primitive_kernel, self.w, self.c)
        return _run_elementwise(kern, x, flops_per_elem=6, trans_per_elem=0)


def _primitive_ref(x, w, c):
    # pure-JAX reference mirroring the PyTorch primitive_function
    mask0 = (x < -w).astype(x.dtype)
    mask1 = (x > w).astype(x.dtype)
    mask2 = jnp.ones_like(x) - mask0 - mask1
    if c == 0.0:
        return mask2 * (x / (2 * w) + 0.5) + mask1
    cw = c * w
    return (mask0 * (c * x + cw)
            + mask1 * (c * x + (-cw + 1.0))
            + mask2 * (x / (2 * w) + 0.5))


if __name__ == "__main__":
    key = jax.random.PRNGKey(0)
    # NCHW input consistent with typical SNN feature maps
    x = jax.random.normal(key, (2, 4, 16, 16), dtype=jnp.float32)

    # spiking=True (default forward): heaviside
    m_spk = PiecewiseLeakyReLU(w=1.0, c=0.01, spiking=True)
    y_spk = jax.block_until_ready(m_spk(x))

    # spiking=False: piecewise-linear primitive, c != 0
    m_prim = PiecewiseLeakyReLU(w=1.0, c=0.01, spiking=False)
    y_prim = jax.block_until_ready(m_prim(x))

    # spiking=False, c == 0 branch
    m_prim0 = PiecewiseLeakyReLU(w=1.0, c=0.0, spiking=False)
    y_prim0 = jax.block_until_ready(m_prim0(x))

    # reference checks (pure JAX)
    ref_spk = (x >= 0).astype(x.dtype)
    ref_prim = _primitive_ref(x, 1.0, 0.01)
    ref_prim0 = _primitive_ref(x, 1.0, 0.0)

    assert y_spk.shape == x.shape and y_spk.dtype == x.dtype
    assert jnp.array_equal(y_spk, ref_spk)
    assert jnp.allclose(y_prim, ref_prim, atol=1e-6, rtol=1e-6)
    assert jnp.allclose(y_prim0, ref_prim0, atol=1e-6, rtol=1e-6)

    print("KERNEL_OK")
</pallas_src>

<mosaic_0001>
module attributes {stable_mosaic.version = 11 : i64} {
  func.func @_plr_spiking_kernel(%arg0: i32, %arg1: memref<16x128xf32, #tpu.memory_space<vmem>>, %arg2: memref<16x128xf32, #tpu.memory_space<vmem>>) attributes {dimension_semantics = [#tpu.dimension_semantics<parallel>], iteration_bounds = array<i64: 1>, scalar_prefetch = 0 : i64, scratch_operands = 0 : i64, tpu.core_type = #tpu.core_type<tc>, window_params = [{transform_indices = @transform_0, window_bounds = array<i64: 16, 128>}, {transform_indices = @transform_1, window_bounds = array<i64: 16, 128>}]} {
    %c0 = arith.constant 0 : index
    %c0_0 = arith.constant 0 : index
    %0 = vector.load %arg1[%c0, %c0_0] : memref<16x128xf32, #tpu.memory_space<vmem>>, vector<16x128xf32>
    %cst = arith.constant 0.000000e+00 : f32
    %1 = vector.broadcast %cst : f32 to vector<16x128xf32>
    %2 = arith.cmpf oge, %0, %1 : vector<16x128xf32>
    %3 = arith.extui %2 : vector<16x128xi1> to vector<16x128xi32>
    %4 = arith.sitofp %3 : vector<16x128xi32> to vector<16x128xf32>
    %c0_1 = arith.constant 0 : index
    %c0_2 = arith.constant 0 : index
    %5 = vector.load %arg2[%c0_1, %c0_2] : memref<16x128xf32, #tpu.memory_space<vmem>>, vector<16x128xf32>
    tpu.vector_store %arg2[%c0_1, %c0_2], %4 {strides = array<i32>} : memref<16x128xf32, #tpu.memory_space<vmem>>, vector<16x128xf32>,
    return
  }
  func.func @transform_0(%arg0: i32) -> (i32, i32) {
    %c0_i32 = arith.constant 0 : i32
    %c0_i32_0 = arith.constant 0 : i32
    return %arg0, %c0_i32 : i32, i32
  }
  func.func @transform_1(%arg0: i32) -> (i32, i32) {
    %c0_i32 = arith.constant 0 : i32
    %c0_i32_0 = arith.constant 0 : i32
    return %arg0, %c0_i32 : i32, i32
  }
}

</mosaic_0001>

<llo_original>
// kernel: tpu_custom_call.1
$region0: #{tpu_custom_call.1}
  #allocation0 [shape = 'u32[]', space=smem, size = 0x4, offset = 0x4, fixed_abs, tag = 'smem constant byte address 0x4 - core index']
  #allocation1 [shape = 'u32[144,128]{1,0:T(1,128)}', space=vmem, size = 0x12000, scoped, tag = 'internal scratch']
  %s0 = inlined_call_operand.hbm [shape: f32[16,128], index: 0, kind: input, shape index: {}]
  %s1 = inlined_call_operand.hbm [shape: f32[16,128], index: 1, kind: output, shape index: {}]
  %s2 = sld [smem:[#allocation0]]
  $region18: #{tpu_custom_call.1} parent=0
    _
  %s4 = ssub.s32 1, %s2
  %s5 = scalar_select 0, %s4, %s2
  $region1: #{tpu_custom_call.1} parent=0
    #allocation2 [shape = 'u8[8192]{0}', space=vmem, size = 0x2000, scoped, tag = 'input window, operand 0, single buffered']
    #allocation3 [shape = 's32[1]{0}', space=sflag, size = 0x4, scoped, tag = 'scoped memory for tpu_custom_call.1']
    #allocation4 [shape = 's32[1]{0}', space=sflag, size = 0x4, scoped, tag = 'scoped memory for tpu_custom_call.1']
    #allocation5 [shape = 'u8[8192]{0}', space=vmem, size = 0x2000, scoped, tag = 'output window, operand 0, single buffered']
    %6 = vsyncpa [#allocation3], 0
    %7 = vsyncpa [#allocation4], 0
    // Predicated region
    $region2: #{tpu_custom_call.1} parent=1 // pred_check
      _
    $region3: #{tpu_custom_call.1} parent=1 // pred_check_branch
      %9 = sbr.rel (0) target = $region5
    $region4: #{tpu_custom_call.1} parent=1 // pred_region
      %s11 = ssub.s32 256, 256
      %12 = vsyncadd [#allocation3], %s11
      %s13 = sshll.u32 [#allocation2], 4
      %s14 = int_to_ptr.vmem [resolvable:$true] %s13
      %19 = dma.hbm_to_vmem [thread:$0]  %s0, 256, %s14, [#allocation3], 128, 128, 8
    $region5: #{tpu_custom_call.1} parent=1 // pred_fallthru
      _
    // Predicated region
    $region6: #{tpu_custom_call.1} parent=1 // pred_check
      _
    $region7: #{tpu_custom_call.1} parent=1 // pred_check_branch
      %21 = sbr.rel (0) target = $region9
    $region8: #{tpu_custom_call.1} parent=1 // pred_region
      %22 = dma.done [#allocation3], 256
    $region9: #{tpu_custom_call.1} parent=1 // pred_fallthru
      _
    %v23 = vld [vmem:[#allocation2] sm:$0xff]
    %v24 = vld [vmem:[#allocation2 + $0x8] sm:$0xff]
    %vm25 = vcmp.ge.f32.partialorder %v23, 0.0
    %vm26 = vcmp.ge.f32.partialorder %v24, 0.0
    %v27 = vsel %vm25, 1, 0
    %v28 = vsel %vm26, 1, 0
    %v29 = vcvt.s32.f32 %v27
    %v30 = vcvt.s32.f32 %v28
    %31 = vst [vmem:[#allocation5] sm:$0xff] %v29
    %32 = vst [vmem:[#allocation5 + $0x8] sm:$0xff] %v30
    // Predicated region
    $region10: #{tpu_custom_call.1} parent=1 // pred_check
      _
    $region11: #{tpu_custom_call.1} parent=1 // pred_check_branch
      %34 = sbr.rel (0) target = $region13
    $region12: #{tpu_custom_call.1} parent=1 // pred_region
      %s36 = ssub.s32 256, 256
      %37 = vsyncadd [#allocation4], %s36
      %s38 = sshll.u32 [#allocation5], 4
      %s39 = int_to_ptr.vmem [resolvable:$true] %s38
      %44 = dma.vmem_to_hbm [thread:$0]  %s39, 256, %s1, [#allocation4], 128, 128, 8
    $region13: #{tpu_custom_call.1} parent=1 // pred_fallthru
      _
    // Predicated region
    $region14: #{tpu_custom_call.1} parent=1 // pred_check
      _
    $region15: #{tpu_custom_call.1} parent=1 // pred_check_branch
      %46 = sbr.rel (0) target = $region17
    $region16: #{tpu_custom_call.1} parent=1 // pred_region
      %47 = dma.done [#allocation4], 256
    $region17: #{tpu_custom_call.1} parent=1 // pred_fallthru
      _
    %48 = vsyncpa [#allocation3], 1
    %49 = vsyncpa [#allocation4], 1

</llo_original>
